<compile_context>
chip_gen: v6e
topology: v6e:2x2x1
jax: 0.10.0
libtpu: 0.0.40
codegen_flags: <defaults>
</compile_context>

<pallas_src>
from functools import partial

import jax
import jax.numpy as jnp
from jax.experimental import pallas as pl
from jax.experimental.pallas import tpu as pltpu

_LANE = 128     # vreg lane width (last dim)
_SUBLANE = 8    # f32 sublane count (second-to-last dim)


def _round_up(n: int, m: int) -> int:
    return ((n + m - 1) // m) * m


def _pad2(a, rows, cols, dtype):
    r, c = a.shape
    return jnp.pad(a, ((0, rows - r), (0, cols - c))).astype(dtype)


def _mlp_kernel(x_ref, w1_ref, b1_ref, w2_ref, b2_ref, w3_ref, b3_ref, o_ref):
    """Fused 3-layer MLP: relu(relu(relu(x@w1+b1)@w2+b2)@w3+b3).

    Layer 1 operands are f32 (keeps raw-input precision; K is tiny so it's free).
    Layers 2/3 use bf16 dot operands (MXU fast path); accumulation, bias-add and
    ReLU are f32 everywhere (keeps VPU math f32-only, important on v5e).
    """
    # Layer 1: (tb, d_in) @ (d_in, H_p) -> (tb, H_p), f32 operands.
    h = jnp.dot(x_ref[...], w1_ref[...], preferred_element_type=jnp.float32)
    h = jnp.maximum(h + b1_ref[...], 0.0)

    # Layer 2 (hidden -> hidden), bf16 operands, f32 accumulate.
    h = jnp.dot(h.astype(w2_ref.dtype), w2_ref[...],
                preferred_element_type=jnp.float32)
    h = jnp.maximum(h + b2_ref[...], 0.0)

    # Output layer (hidden -> out), final ReLU per the PyTorch module.
    o = jnp.dot(h.astype(w3_ref.dtype), w3_ref[...],
                preferred_element_type=jnp.float32)
    o_ref[...] = jnp.maximum(o + b3_ref[...], 0.0).astype(o_ref.dtype)


def numeric_encoder_forward_pallas(x, params, *, block_b=1024):
    """Fused NumericEncoder forward (num_layers=2) as one pallas_call.

    x: (B, input_dim) float32
    params: dict with w1 (D_in,H), b1 (1,H), w2 (H,H), b2 (1,H),
            w3 (H,D_out), b3 (1,D_out), all float32.
    Returns (B, output_dim) float32.
    """
    B, d_in = x.shape
    H = params["w1"].shape[1]
    d_out = params["w3"].shape[1]

    assert block_b % _SUBLANE == 0, "block_b must be a multiple of 8 (f32 sublane)"

    # Hidden dim lane-padded to 128 so in-kernel activations are lane-dense; hidden
    # activations never touch HBM so this adds no DMA traffic (weights are tiny).
    # Input/output feature dims stay UNPADDED: their blocks equal the full last dim
    # (legal), which keeps per-row x / out HBM bytes minimal.
    H_p = _round_up(H, _LANE)

    # Batch tile: multiple of the 8-row f32 sublane, big enough to amortize the
    # ~0.35us per-grid-step overhead, but capped so the grid keeps >= 2 steps
    # whenever possible (the "parallel" batch axis feeds both TCs on v7x).
    tb = min(block_b, _round_up(B, _SUBLANE))
    if B > _SUBLANE:
        tb = min(tb, _round_up(pl.cdiv(B, 2), _SUBLANE))
    B_p = _round_up(B, tb)

    w_dt = jnp.bfloat16  # MXU operand dtype for the hidden/output layers

    w1 = _pad2(params["w1"], d_in, H_p, jnp.float32)   # layer-1 stays f32
    b1 = _pad2(params["b1"], 1, H_p, jnp.float32)
    w2 = _pad2(params["w2"], H_p, H_p, w_dt)
    b2 = _pad2(params["b2"], 1, H_p, jnp.float32)
    w3 = _pad2(params["w3"], H_p, d_out, w_dt)
    b3 = _pad2(params["b3"], 1, d_out, jnp.float32)

    # Only the slim (B, d_in) array is ever batch-padded (and only when needed).
    x_p = x if B_p == B else jnp.pad(x, ((0, B_p - B), (0, 0)))

    grid = (B_p // tb,)

    # Weights/biases are small and constant across grid steps: replicate full blocks.
    def full(shape):
        return pl.BlockSpec(shape, lambda i: (0,) * len(shape))

    out_p = pl.pallas_call(
        _mlp_kernel,
        out_shape=jax.ShapeDtypeStruct((B_p, d_out), jnp.float32),
        grid_spec=pltpu.PrefetchScalarGridSpec(
            num_scalar_prefetch=0,
            grid=grid,
            in_specs=[
                pl.BlockSpec((tb, d_in), lambda i: (i, 0)),  # x tile over batch
                full((d_in, H_p)),                           # w1 (f32)
                full((1, H_p)),                              # b1
                full((H_p, H_p)),                            # w2 (bf16)
                full((1, H_p)),                              # b2
                full((H_p, d_out)),                          # w3 (bf16)
                full((1, d_out)),                            # b3
            ],
            out_specs=pl.BlockSpec((tb, d_out), lambda i: (i, 0)),
        ),
        compiler_params=pltpu.CompilerParams(
            # Batch tiles are independent => grid steps shard across v7x's 2 TCs.
            dimension_semantics=("parallel",),
        ),
    )(x_p, w1, b1, w2, b2, w3, b3)

    # Drop batch padding (output feature dim is already unpadded).
    return out_p if B_p == B else out_p[:B]


def _xla_forward(x, params):
    """Plain-XLA path (also the numerics-matched reference): same dtype policy as
    the Pallas kernel — layer-1 f32 operands, layers 2/3 bf16 dot operands, f32
    accumulate / bias / ReLU."""
    h = jnp.maximum(
        jnp.dot(x, params["w1"], preferred_element_type=jnp.float32) + params["b1"], 0.0)
    h = jnp.maximum(
        jnp.dot(h.astype(jnp.bfloat16), params["w2"].astype(jnp.bfloat16),
                preferred_element_type=jnp.float32) + params["b2"], 0.0)
    return jnp.maximum(
        jnp.dot(h.astype(jnp.bfloat16), params["w3"].astype(jnp.bfloat16),
                preferred_element_type=jnp.float32) + params["b3"], 0.0)


@partial(jax.jit,
         static_argnames=("block_b", "min_pallas_batch", "force_pallas", "training"))
def numeric_encoder_forward(x, params, *, block_b=1024, min_pallas_batch=1024,
                            force_pallas=False, training=False):
    """Dispatch: tiny batches go through plain XLA (pallas_call fixed overhead
    dominates there); larger batches use the fused, pipelined Pallas kernel.
    jit-wrapped so the residual pad/cast/slice ops fuse around the pallas_call."""
    if training:
        # TODO(synk): training-mode dropout not implemented in the Pallas kernel.
        raise NotImplementedError(
            "NumericEncoder Pallas kernel is inference-only (dropout elided).")
    if x.shape[0] < min_pallas_batch and not force_pallas:
        return _xla_forward(x, params)
    return numeric_encoder_forward_pallas(x, params, block_b=block_b)


def init_params(key, input_dim, hidden_dim, output_dim):
    """Deterministic synthetic parameters (PyTorch Linear-style uniform init)."""
    ks = jax.random.split(key, 6)

    def lin(kw, kb, fan_in, fan_out):
        bound = 1.0 / jnp.sqrt(fan_in)
        w = jax.random.uniform(kw, (fan_in, fan_out), jnp.float32, -bound, bound)
        b = jax.random.uniform(kb, (1, fan_out), jnp.float32, -bound, bound)
        return w, b

    w1, b1 = lin(ks[0], ks[1], input_dim, hidden_dim)
    w2, b2 = lin(ks[2], ks[3], hidden_dim, hidden_dim)
    w3, b3 = lin(ks[4], ks[5], hidden_dim, output_dim)
    return dict(w1=w1, b1=b1, w2=w2, b2=b2, w3=w3, b3=b3)


if __name__ == "__main__":
    # Shapes consistent with the module defaults: input_dim=16, hidden_dim=64,
    # output_dim=32, num_layers=2.
    input_dim, hidden_dim, output_dim = 16, 64, 32

    key = jax.random.PRNGKey(0)
    kx1, kx2, kp = jax.random.split(key, 3)
    params = init_params(kp, input_dim, hidden_dim, output_dim)

    # Tolerance covers bf16 dot operands in layers 2/3 plus any small precision
    # difference between the Mosaic and XLA f32 matmul lowerings in layer 1.
    TOL = 2e-2

    # 1) Small batch, forced through the Pallas path (exercises batch padding to
    #    the 8-row sublane, full-feature-dim blocks, and the single-step grid).
    x_small = jax.random.normal(kx1, (8, input_dim), jnp.float32)
    out_small = jax.block_until_ready(
        numeric_encoder_forward(x_small, params, force_pallas=True))
    ref_small = _xla_forward(x_small, params)
    assert out_small.shape == (8, output_dim), out_small.shape
    assert jnp.allclose(out_small, ref_small, atol=TOL, rtol=TOL), \
        "small-batch mismatch vs reference"

    # 2) Larger, non-divisible batch: slim batch pad, multi-step pipelined grid
    #    (>= 2 steps so both v7x TensorCores get work).
    x_big = jax.random.normal(kx2, (1000, input_dim), jnp.float32)
    out_big = jax.block_until_ready(
        numeric_encoder_forward(x_big, params, block_b=384, force_pallas=True))
    ref_big = _xla_forward(x_big, params)
    assert out_big.shape == (1000, output_dim), out_big.shape
    assert jnp.allclose(out_big, ref_big, atol=TOL, rtol=TOL), \
        "large-batch mismatch vs reference"

    print("KERNEL_OK")
</pallas_src>

<mosaic_0001>
module attributes {stable_mosaic.version = 11 : i64} {
  func.func @_mlp_kernel(%arg0: i32, %arg1: memref<8x16xf32, #tpu.memory_space<vmem>>, %arg2: memref<16x128xf32, #tpu.memory_space<vmem>>, %arg3: memref<1x128xf32, #tpu.memory_space<vmem>>, %arg4: memref<128x128xbf16, #tpu.memory_space<vmem>>, %arg5: memref<1x128xf32, #tpu.memory_space<vmem>>, %arg6: memref<128x32xbf16, #tpu.memory_space<vmem>>, %arg7: memref<1x32xf32, #tpu.memory_space<vmem>>, %arg8: memref<8x32xf32, #tpu.memory_space<vmem>>) attributes {dimension_semantics = [#tpu.dimension_semantics<parallel>], iteration_bounds = array<i64: 1>, scalar_prefetch = 0 : i64, scratch_operands = 0 : i64, tpu.core_type = #tpu.core_type<tc>, window_params = [{transform_indices = @transform_0, window_bounds = array<i64: 8, 16>}, {pipeline_mode = #tpu.pipeline_mode<synchronous>, transform_indices = @transform_1, window_bounds = array<i64: 16, 128>}, {pipeline_mode = #tpu.pipeline_mode<synchronous>, transform_indices = @transform_2, window_bounds = array<i64: 1, 128>}, {pipeline_mode = #tpu.pipeline_mode<synchronous>, transform_indices = @transform_3, window_bounds = array<i64: 128, 128>}, {pipeline_mode = #tpu.pipeline_mode<synchronous>, transform_indices = @transform_4, window_bounds = array<i64: 1, 128>}, {pipeline_mode = #tpu.pipeline_mode<synchronous>, transform_indices = @transform_5, window_bounds = array<i64: 128, 32>}, {pipeline_mode = #tpu.pipeline_mode<synchronous>, transform_indices = @transform_6, window_bounds = array<i64: 1, 32>}, {transform_indices = @transform_7, window_bounds = array<i64: 8, 32>}]} {
    %c0 = arith.constant 0 : index
    %c0_0 = arith.constant 0 : index
    %0 = vector.load %arg1[%c0, %c0_0] : memref<8x16xf32, #tpu.memory_space<vmem>>, vector<8x16xf32>
    %c0_1 = arith.constant 0 : index
    %c0_2 = arith.constant 0 : index
    %1 = vector.load %arg2[%c0_1, %c0_2] : memref<16x128xf32, #tpu.memory_space<vmem>>, vector<16x128xf32>
    %cst = arith.constant dense<0.000000e+00> : vector<8x128xf32>
    %2 = tpu.matmul %0, %1, %cst {dimension_numbers = #tpu.dot_dimension_numbers<[1], [0], [0], [1], [0, 0, 1, 1], [], []>} : vector<8x16xf32>, vector<16x128xf32>, vector<8x128xf32> -> vector<8x128xf32>
    %c0_3 = arith.constant 0 : index
    %c0_4 = arith.constant 0 : index
    %3 = vector.load %arg3[%c0_3, %c0_4] : memref<1x128xf32, #tpu.memory_space<vmem>>, vector<1x128xf32>
    %4 = vector.broadcast %3 : vector<1x128xf32> to vector<8x128xf32>
    %5 = arith.addf %2, %4 : vector<8x128xf32>
    %cst_5 = arith.constant 0.000000e+00 : f32
    %6 = vector.broadcast %cst_5 : f32 to vector<8x128xf32>
    %7 = arith.maximumf %5, %6 : vector<8x128xf32>
    %8 = arith.truncf %7 : vector<8x128xf32> to vector<8x128xbf16>
    %c0_6 = arith.constant 0 : index
    %c0_7 = arith.constant 0 : index
    %9 = vector.load %arg4[%c0_6, %c0_7] : memref<128x128xbf16, #tpu.memory_space<vmem>>, vector<128x128xbf16>
    %cst_8 = arith.constant dense<0.000000e+00> : vector<8x128xf32>
    %10 = tpu.matmul %8, %9, %cst_8 {dimension_numbers = #tpu.dot_dimension_numbers<[1], [0], [0], [1], [0, 0, 1, 1], [], []>} : vector<8x128xbf16>, vector<128x128xbf16>, vector<8x128xf32> -> vector<8x128xf32>
    %c0_9 = arith.constant 0 : index
    %c0_10 = arith.constant 0 : index
    %11 = vector.load %arg5[%c0_9, %c0_10] : memref<1x128xf32, #tpu.memory_space<vmem>>, vector<1x128xf32>
    %12 = vector.broadcast %11 : vector<1x128xf32> to vector<8x128xf32>
    %13 = arith.addf %10, %12 : vector<8x128xf32>
    %cst_11 = arith.constant 0.000000e+00 : f32
    %14 = vector.broadcast %cst_11 : f32 to vector<8x128xf32>
    %15 = arith.maximumf %13, %14 : vector<8x128xf32>
    %16 = arith.truncf %15 : vector<8x128xf32> to vector<8x128xbf16>
    %c0_12 = arith.constant 0 : index
    %c0_13 = arith.constant 0 : index
    %17 = vector.load %arg6[%c0_12, %c0_13] : memref<128x32xbf16, #tpu.memory_space<vmem>>, vector<128x32xbf16>
    %cst_14 = arith.constant dense<0.000000e+00> : vector<8x32xf32>
    %18 = tpu.matmul %16, %17, %cst_14 {dimension_numbers = #tpu.dot_dimension_numbers<[1], [0], [0], [1], [0, 0, 1, 1], [], []>} : vector<8x128xbf16>, vector<128x32xbf16>, vector<8x32xf32> -> vector<8x32xf32>
    %c0_15 = arith.constant 0 : index
    %c0_16 = arith.constant 0 : index
    %19 = vector.load %arg7[%c0_15, %c0_16] : memref<1x32xf32, #tpu.memory_space<vmem>>, vector<1x32xf32>
    %20 = vector.broadcast %19 : vector<1x32xf32> to vector<8x32xf32>
    %21 = arith.addf %18, %20 : vector<8x32xf32>
    %cst_17 = arith.constant 0.000000e+00 : f32
    %22 = vector.broadcast %cst_17 : f32 to vector<8x32xf32>
    %23 = arith.maximumf %21, %22 : vector<8x32xf32>
    %c0_18 = arith.constant 0 : index
    %c0_19 = arith.constant 0 : index
    %24 = vector.load %arg8[%c0_18, %c0_19] : memref<8x32xf32, #tpu.memory_space<vmem>>, vector<8x32xf32>
    tpu.vector_store %arg8[%c0_18, %c0_19], %23 {strides = array<i32>} : memref<8x32xf32, #tpu.memory_space<vmem>>, vector<8x32xf32>,
    return
  }
  func.func @transform_0(%arg0: i32) -> (i32, i32) {
    %c0_i32 = arith.constant 0 : i32
    %c0_i32_0 = arith.constant 0 : i32
    return %arg0, %c0_i32 : i32, i32
  }
  func.func @transform_1(%arg0: i32) -> (i32, i32) {
    %c0_i32 = arith.constant 0 : i32
    %c0_i32_0 = arith.constant 0 : i32
    %c0_i32_1 = arith.constant 0 : i32
    return %c0_i32, %c0_i32_0 : i32, i32
  }
  func.func @transform_2(%arg0: i32) -> (i32, i32) {
    %c0_i32 = arith.constant 0 : i32
    %c0_i32_0 = arith.constant 0 : i32
    %c0_i32_1 = arith.constant 0 : i32
    return %c0_i32, %c0_i32_0 : i32, i32
  }
  func.func @transform_3(%arg0: i32) -> (i32, i32) {
    %c0_i32 = arith.constant 0 : i32
    %c0_i32_0 = arith.constant 0 : i32
    %c0_i32_1 = arith.constant 0 : i32
    return %c0_i32, %c0_i32_0 : i32, i32
  }
  func.func @transform_4(%arg0: i32) -> (i32, i32) {
    %c0_i32 = arith.constant 0 : i32
    %c0_i32_0 = arith.constant 0 : i32
    %c0_i32_1 = arith.constant 0 : i32
    return %c0_i32, %c0_i32_0 : i32, i32
  }
  func.func @transform_5(%arg0: i32) -> (i32, i32) {
    %c0_i32 = arith.constant 0 : i32
    %c0_i32_0 = arith.constant 0 : i32
    %c0_i32_1 = arith.constant 0 : i32
    return %c0_i32, %c0_i32_0 : i32, i32
  }
  func.func @transform_6(%arg0: i32) -> (i32, i32) {
    %c0_i32 = arith.constant 0 : i32
    %c0_i32_0 = arith.constant 0 : i32
    %c0_i32_1 = arith.constant 0 : i32
    return %c0_i32, %c0_i32_0 : i32, i32
  }
  func.func @transform_7(%arg0: i32) -> (i32, i32) {
    %c0_i32 = arith.constant 0 : i32
    %c0_i32_0 = arith.constant 0 : i32
    return %arg0, %c0_i32 : i32, i32
  }
}

</mosaic_0001>

<llo_original>
// kernel: numeric_encoder_forward.1
$region0: #{numeric_encoder_forward.1}
  #allocation0 [shape = 'u32[]', space=smem, size = 0x4, offset = 0x4, fixed_abs, tag = 'smem constant byte address 0x4 - core index']
  #allocation1 [shape = 'u32[144,128]{1,0:T(1,128)}', space=vmem, size = 0x12000, scoped, tag = 'internal scratch']
  %s0 = inlined_call_operand.vmem [shape: f32[8,16], index: 0, kind: input, shape index: {}]
  %s1 = inlined_call_operand.vmem [shape: f32[16,128], index: 1, kind: input, shape index: {}]
  %s2 = inlined_call_operand.vmem [shape: f32[1,128], index: 2, kind: input, shape index: {}]
  %s3 = inlined_call_operand.vmem [shape: bf16[128,128], index: 3, kind: input, shape index: {}]
  %s4 = inlined_call_operand.vmem [shape: f32[1,128], index: 4, kind: input, shape index: {}]
  %s5 = inlined_call_operand.vmem [shape: bf16[128,32], index: 5, kind: input, shape index: {}]
  %s6 = inlined_call_operand.vmem [shape: f32[1,32], index: 6, kind: input, shape index: {}]
  %s7 = inlined_call_operand.hbm [shape: f32[8,32], index: 7, kind: output, shape index: {}]
  %s8 = sld [smem:[#allocation0]]
  $region38: #{numeric_encoder_forward.1} parent=0
    _
  %s10 = ssub.s32 1, %s8
  %s11 = scalar_select 0, %s10, %s8
  $region1: #{numeric_encoder_forward.1} parent=0
    #allocation2 [shape = 'u8[4096]{0}', space=vmem, size = 0x1000, scoped, tag = 'output window, operand 0, single buffered']
    #allocation3 [shape = 's32[1]{0}', space=sflag, size = 0x4, scoped, tag = 'scoped memory for numeric_encoder_forward.1']
    %12 = vsyncpa [#allocation3], 0
    // Predicated region
    $region2: #{numeric_encoder_forward.1} parent=1 // pred_check
      _
    $region3: #{numeric_encoder_forward.1} parent=1 // pred_check_branch
      %14 = sbr.rel (0) target = $region5
    $region4: #{numeric_encoder_forward.1} parent=1 // pred_region
      _
    $region5: #{numeric_encoder_forward.1} parent=1 // pred_fallthru
      _
    // Predicated region
    $region6: #{numeric_encoder_forward.1} parent=1 // pred_check
      _
    $region7: #{numeric_encoder_forward.1} parent=1 // pred_check_branch
      %16 = sbr.rel (0) target = $region9
    $region8: #{numeric_encoder_forward.1} parent=1 // pred_region
      _
    $region9: #{numeric_encoder_forward.1} parent=1 // pred_fallthru
      _
    // Predicated region
    $region10: #{numeric_encoder_forward.1} parent=1 // pred_check
      _
    $region11: #{numeric_encoder_forward.1} parent=1 // pred_check_branch
      %18 = sbr.rel (0) target = $region13
    $region12: #{numeric_encoder_forward.1} parent=1 // pred_region
      _
    $region13: #{numeric_encoder_forward.1} parent=1 // pred_fallthru
      _
    // Predicated region
    $region14: #{numeric_encoder_forward.1} parent=1 // pred_check
      _
    $region15: #{numeric_encoder_forward.1} parent=1 // pred_check_branch
      %20 = sbr.rel (0) target = $region17
    $region16: #{numeric_encoder_forward.1} parent=1 // pred_region
      _
    $region17: #{numeric_encoder_forward.1} parent=1 // pred_fallthru
      _
    // Predicated region
    $region18: #{numeric_encoder_forward.1} parent=1 // pred_check
      _
    $region19: #{numeric_encoder_forward.1} parent=1 // pred_check_branch
      %22 = sbr.rel (0) target = $region21
    $region20: #{numeric_encoder_forward.1} parent=1 // pred_region
      _
    $region21: #{numeric_encoder_forward.1} parent=1 // pred_fallthru
      _
    // Predicated region
    $region22: #{numeric_encoder_forward.1} parent=1 // pred_check
      _
    $region23: #{numeric_encoder_forward.1} parent=1 // pred_check_branch
      %24 = sbr.rel (0) target = $region25
    $region24: #{numeric_encoder_forward.1} parent=1 // pred_region
      _
    $region25: #{numeric_encoder_forward.1} parent=1 // pred_fallthru
      _
    // Predicated region
    $region26: #{numeric_encoder_forward.1} parent=1 // pred_check
      _
    $region27: #{numeric_encoder_forward.1} parent=1 // pred_check_branch
      %26 = sbr.rel (0) target = $region29
    $region28: #{numeric_encoder_forward.1} parent=1 // pred_region
      _
    $region29: #{numeric_encoder_forward.1} parent=1 // pred_fallthru
      _
    %v28 = vld [vmem:[%s0] sm:$0xff]
    %v29 = vld [vmem:[%s1] sm:$0xff]
    %v30 = vld [vmem:[%s1 + $0x8] sm:$0xff]
    %v31 = vld [vmem:[%s2] sm:$0x1]
    %v33 = vlaneseq
    %v34 = vshrl.u32 %v33, 7
    %v35 = vsub.s32 0, %v34
    %v36 = vrot.slane %v31, %v35
    %vm38 = vcmask 130048
    %v40 = vsel %vm38, %v28, 0
    %42 = vmatprep.subr.mxu0 0.0
    %43 = vmatpush1.msra.mxu0 0.0
    %44 = vmatprep.subr.mxu0 0.0
    %45 = vmatpush1.msra.mxu0 0.0
    %46 = vmatprep.subr.mxu0 0.0
    %47 = vmatpush1.msra.mxu0 0.0
    %48 = vmatprep.subr.mxu0 0.0
    %49 = vmatpush1.msra.mxu0 0.0
    %50 = vmatprep.subr.mxu0 0.0
    %51 = vmatpush1.msra.mxu0 0.0
    %52 = vmatprep.subr.mxu0 0.0
    %53 = vmatpush1.msra.mxu0 0.0
    %54 = vmatprep.subr.mxu0 0.0
    %55 = vmatpush1.msra.mxu0 0.0
    %56 = vmatprep.subr.mxu0 0.0
    %57 = vmatpush1.msra.mxu0 0.0
    %58 = vmatprep.subr.mxu0 0.0
    %59 = vmatpush1.msra.mxu0 0.0
    %60 = vmatprep.subr.mxu0 0.0
    %61 = vmatpush1.msra.mxu0 0.0
    %62 = vmatprep.subr.mxu0 0.0
    %63 = vmatpush1.msra.mxu0 0.0
    %64 = vmatprep.subr.mxu0 0.0
    %65 = vmatpush1.msra.mxu0 0.0
    %66 = vmatprep.subr.mxu0 0.0
    %67 = vmatpush1.msra.mxu0 0.0
    %68 = vmatprep.subr.mxu0 0.0
    %69 = vmatpush1.msra.mxu0 0.0
    %70 = vmatprep.subr.mxu0 0.0
    %71 = vmatpush1.msra.mxu0 %v30
    %72 = vmatprep.subr.mxu0 0.0
    %73 = vmatpush1.msra.mxu0 %v29
    %74 = vmatprep.subr.mxu0 0.0
    %75 = vmatpush2.msra.mxu0 0.0
    %76 = vmatprep.subr.mxu0 0.0
    %77 = vmatpush2.msra.mxu0 0.0
    %78 = vmatprep.subr.mxu0 0.0
    %79 = vmatpush2.msra.mxu0 0.0
    %80 = vmatprep.subr.mxu0 0.0
    %81 = vmatpush2.msra.mxu0 0.0
    %82 = vmatprep.subr.mxu0 0.0
    %83 = vmatpush2.msra.mxu0 0.0
    %84 = vmatprep.subr.mxu0 0.0
    %85 = vmatpush2.msra.mxu0 0.0
    %86 = vmatprep.subr.mxu0 0.0
    %87 = vmatpush2.msra.mxu0 0.0
    %88 = vmatprep.subr.mxu0 0.0
    %89 = vmatpush2.msra.mxu0 0.0
    %90 = vmatprep.subr.mxu0 0.0
    %91 = vmatpush2.msra.mxu0 0.0
    %92 = vmatprep.subr.mxu0 0.0
    %93 = vmatpush2.msra.mxu0 0.0
    %94 = vmatprep.subr.mxu0 0.0
    %95 = vmatpush2.msra.mxu0 0.0
    %96 = vmatprep.subr.mxu0 0.0
    %97 = vmatpush2.msra.mxu0 0.0
    %98 = vmatprep.subr.mxu0 0.0
    %99 = vmatpush2.msra.mxu0 0.0
    %100 = vmatprep.subr.mxu0 0.0
    %101 = vmatpush2.msra.mxu0 0.0
    %102 = vmatprep.subr.mxu0 0.0
    %103 = vmatpush2.msra.mxu0 0.0
    %104 = vmatprep.subr.mxu0 0.0
    %105 = vmatpush2.msra.mxu0 0.0
    %106 = vmatprep.mubr.f32.mxu0 0.0
    %107 = vmatmul.mubr.f32.gmra.mxu0 %v40
    %v108 = vpop.f32.mrf.mxu0
    %v109 = vadd.f32 %v36, %v108
    %v110 = vpop.f32.mrf.mxu0
    %111 = vdwg.mxu0
    %v112 = vmax.f32 %v109, 0.0
    %v113 = vpack.c.bf16 %v112, %v112
    %v114 = vld [vmem:[%s3] sm:$0xf]
    %v115 = vld [vmem:[%s3 + $0x4] sm:$0xf]
    %v116 = vld [vmem:[%s3 + $0x8] sm:$0xf]
    %v117 = vld [vmem:[%s3 + $0xc] sm:$0xf]
    %v118 = vld [vmem:[%s3 + $0x10] sm:$0xf]
    %v119 = vld [vmem:[%s3 + $0x14] sm:$0xf]
    %v120 = vld [vmem:[%s3 + $0x18] sm:$0xf]
    %v121 = vld [vmem:[%s3 + $0x1c] sm:$0xf]
    %v122 = vld [vmem:[%s3 + $0x20] sm:$0xf]
    %v123 = vld [vmem:[%s3 + $0x24] sm:$0xf]
    %v124 = vld [vmem:[%s3 + $0x28] sm:$0xf]
    %v125 = vld [vmem:[%s3 + $0x2c] sm:$0xf]
    %v126 = vld [vmem:[%s3 + $0x30] sm:$0xf]
    %v127 = vld [vmem:[%s3 + $0x34] sm:$0xf]
    %v128 = vld [vmem:[%s3 + $0x38] sm:$0xf]
    %v129 = vld [vmem:[%s3 + $0x3c] sm:$0xf]
    %v130 = vld [vmem:[%s4] sm:$0x1]
    %v132 = vlaneseq
    %v133 = vshrl.u32 %v132, 7
    %v134 = vsub.s32 0, %v133
    %v135 = vrot.slane %v130, %v134
    %v153 = vunpack.c.l.b16 %v114
    %v154 = vunpack.c.l.b16 %v115
    %v155 = vunpack.c.l.b16 %v116
    %v156 = vunpack.c.l.b16 %v117
    %v157 = vunpack.c.l.b16 %v118
    %v158 = vunpack.c.l.b16 %v119
    %v159 = vunpack.c.l.b16 %v120
    %v160 = vunpack.c.l.b16 %v121
    %v161 = vunpack.c.l.b16 %v122
    %v162 = vunpack.c.l.b16 %v123
    %v163 = vunpack.c.l.b16 %v124
    %v164 = vunpack.c.l.b16 %v125
    %v165 = vunpack.c.l.b16 %v126
    %v166 = vunpack.c.l.b16 %v127
    %v167 = vunpack.c.l.b16 %v128
    %v168 = vunpack.c.l.b16 %v129
    %v169 = vpack.c.b16 %v154, %v153
    %v170 = vpack.c.b16 %v156, %v155
    %v171 = vpack.c.b16 %v158, %v157
    %v172 = vpack.c.b16 %v160, %v159
    %v173 = vpack.c.b16 %v162, %v161
    %v174 = vpack.c.b16 %v164, %v163
    %v175 = vpack.c.b16 %v166, %v165
    %v176 = vpack.c.b16 %v168, %v167
    %185 = vmatprep.subr.bf16.mxu0 0
    %186 = vmatpush1.bf16.msra.mxu0 %v176
    %187 = vmatprep.subr.bf16.mxu0 0
    %188 = vmatpush1.bf16.msra.mxu0 %v175
    %189 = vmatprep.subr.bf16.mxu0 0
    %190 = vmatpush1.bf16.msra.mxu0 %v174
    %191 = vmatprep.subr.bf16.mxu0 0
    %192 = vmatpush1.bf16.msra.mxu0 %v173
    %193 = vmatprep.subr.bf16.mxu0 0
    %194 = vmatpush1.bf16.msra.mxu0 %v172
    %195 = vmatprep.subr.bf16.mxu0 0
    %196 = vmatpush1.bf16.msra.mxu0 %v171
    %197 = vmatprep.subr.bf16.mxu0 0
    %198 = vmatpush1.bf16.msra.mxu0 %v170
    %199 = vmatprep.subr.bf16.mxu0 0
    %200 = vmatpush1.bf16.msra.mxu0 %v169
    %201 = vmatprep.subr.bf16.mxu0 0
    %202 = vmatpush2.bf16.msra.mxu0 0
    %203 = vmatprep.subr.bf16.mxu0 0
    %204 = vmatpush2.bf16.msra.mxu0 0
    %205 = vmatprep.subr.bf16.mxu0 0
    %206 = vmatpush2.bf16.msra.mxu0 0
    %207 = vmatprep.subr.bf16.mxu0 0
    %208 = vmatpush2.bf16.msra.mxu0 0
    %209 = vmatprep.subr.bf16.mxu0 0
    %210 = vmatpush2.bf16.msra.mxu0 0
    %211 = vmatprep.subr.bf16.mxu0 0
    %212 = vmatpush2.bf16.msra.mxu0 0
    %213 = vmatprep.subr.bf16.mxu0 0
    %214 = vmatpush2.bf16.msra.mxu0 0
    %215 = vmatprep.subr.bf16.mxu0 0
    %216 = vmatpush2.bf16.msra.mxu0 0
    %217 = vmatprep.mubr.bf16.mxu0 0
    %218 = vmatmul.mubr.bf16.gmra.mxu0 %v113
    %v219 = vpop.f32.mrf.mxu0
    %v220 = vadd.f32 %v135, %v219
    %v221 = vpop.f32.mrf.mxu0
    %v222 = vpop.f32.mrf.mxu0
    %v223 = vpop.f32.mrf.mxu0
    %224 = vdwg.mxu0
    %v225 = vmax.f32 %v220, 0.0
    %v226 = vpack.c.bf16 %v225, %v225
    %v227 = vld [vmem:[%s5] sm:$0xf]
    %v228 = vld [vmem:[%s5 + $0x4] sm:$0xf]
    %v229 = vld [vmem:[%s5 + $0x8] sm:$0xf]
    %v230 = vld [vmem:[%s5 + $0xc] sm:$0xf]
    %v231 = vld [vmem:[%s5 + $0x10] sm:$0xf]
    %v232 = vld [vmem:[%s5 + $0x14] sm:$0xf]
    %v233 = vld [vmem:[%s5 + $0x18] sm:$0xf]
    %v234 = vld [vmem:[%s5 + $0x1c] sm:$0xf]
    %v235 = vld [vmem:[%s5 + $0x20] sm:$0xf]
    %v236 = vld [vmem:[%s5 + $0x24] sm:$0xf]
    %v237 = vld [vmem:[%s5 + $0x28] sm:$0xf]
    %v238 = vld [vmem:[%s5 + $0x2c] sm:$0xf]
    %v239 = vld [vmem:[%s5 + $0x30] sm:$0xf]
    %v240 = vld [vmem:[%s5 + $0x34] sm:$0xf]
    %v241 = vld [vmem:[%s5 + $0x38] sm:$0xf]
    %v242 = vld [vmem:[%s5 + $0x3c] sm:$0xf]
    %v243 = vld [vmem:[%s6] sm:$0x1]
    %v245 = vlaneseq
    %v246 = vshrl.u32 %v245, 7
    %v247 = vsub.s32 0, %v246
    %v248 = vrot.slane %v243, %v247
    %v266 = vunpack.c.l.b16 %v227
    %v267 = vunpack.c.l.b16 %v228
    %v268 = vunpack.c.l.b16 %v229
    %v269 = vunpack.c.l.b16 %v230
    %v270 = vunpack.c.l.b16 %v231
    %v271 = vunpack.c.l.b16 %v232
    %v272 = vunpack.c.l.b16 %v233
    %v273 = vunpack.c.l.b16 %v234
    %v274 = vunpack.c.l.b16 %v235
    %v275 = vunpack.c.l.b16 %v236
    %v276 = vunpack.c.l.b16 %v237
    %v277 = vunpack.c.l.b16 %v238
    %v278 = vunpack.c.l.b16 %v239
    %v279 = vunpack.c.l.b16 %v240
    %v280 = vunpack.c.l.b16 %v241
    %v281 = vunpack.c.l.b16 %v242
    %v282 = vpack.c.b16 %v267, %v266
    %v283 = vpack.c.b16 %v269, %v268
    %v284 = vpack.c.b16 %v271, %v270
    %v285 = vpack.c.b16 %v273, %v272
    %v286 = vpack.c.b16 %v275, %v274
    %v287 = vpack.c.b16 %v277, %v276
    %v288 = vpack.c.b16 %v279, %v278
    %v289 = vpack.c.b16 %v281, %v280
    %298 = vmatprep.subr.bf16.mxu0 0
    %299 = vmatpush1.bf16.msra.mxu0 %v289
    %300 = vmatprep.subr.bf16.mxu0 0
    %301 = vmatpush1.bf16.msra.mxu0 %v288
    %302 = vmatprep.subr.bf16.mxu0 0
    %303 = vmatpush1.bf16.msra.mxu0 %v287
    %304 = vmatprep.subr.bf16.mxu0 0
    %305 = vmatpush1.bf16.msra.mxu0 %v286
    %306 = vmatprep.subr.bf16.mxu0 0
    %307 = vmatpush1.bf16.msra.mxu0 %v285
    %308 = vmatprep.subr.bf16.mxu0 0
    %309 = vmatpush1.bf16.msra.mxu0 %v284
    %310 = vmatprep.subr.bf16.mxu0 0
    %311 = vmatpush1.bf16.msra.mxu0 %v283
    %312 = vmatprep.subr.bf16.mxu0 0
    %313 = vmatpush1.bf16.msra.mxu0 %v282
    %314 = vmatprep.subr.bf16.mxu0 0
    %315 = vmatpush2.bf16.msra.mxu0 0
    %316 = vmatprep.subr.bf16.mxu0 0
    %317 = vmatpush2.bf16.msra.mxu0 0
    %318 = vmatprep.subr.bf16.mxu0 0
    %319 = vmatpush2.bf16.msra.mxu0 0
    %320 = vmatprep.subr.bf16.mxu0 0
    %321 = vmatpush2.bf16.msra.mxu0 0
    %322 = vmatprep.subr.bf16.mxu0 0
    %323 = vmatpush2.bf16.msra.mxu0 0
    %324 = vmatprep.subr.bf16.mxu0 0
    %325 = vmatpush2.bf16.msra.mxu0 0
    %326 = vmatprep.subr.bf16.mxu0 0
    %327 = vmatpush2.bf16.msra.mxu0 0
    %328 = vmatprep.subr.bf16.mxu0 0
    %329 = vmatpush2.bf16.msra.mxu0 0
    %330 = vmatprep.mubr.bf16.mxu0 0
    %331 = vmatmul.mubr.bf16.gmra.mxu0 %v226
    %v332 = vpop.f32.mrf.mxu0
    %v333 = vadd.f32 %v248, %v332
    %v334 = vpop.f32.mrf.mxu0
    %v335 = vpop.f32.mrf.mxu0
    %v336 = vpop.f32.mrf.mxu0
    %337 = vdwg.mxu0
    %v338 = vmax.f32 %v333, 0.0
    %vm339 = vcmask 261120
    %340 = vst.msk [vmem:[#allocation2] sm:$0xff] %vm339, %v338
    // Predicated region
    $region30: #{numeric_encoder_forward.1} parent=1 // pred_check
      _
    $region31: #{numeric_encoder_forward.1} parent=1 // pred_check_branch
      %342 = sbr.rel (0) target = $region33
    $region32: #{numeric_encoder_forward.1} parent=1 // pred_region
      %s344 = ssub.s32 128, 128
      %345 = vsyncadd [#allocation3], %s344
      %s347 = sshll.u32 [#allocation2], 4
      %s348 = int_to_ptr.vmem [resolvable:$true] %s347
      %350 = dma.vmem_to_hbm [thread:$0]  %s348, 128, %s7, [#allocation3]
    $region33: #{numeric_encoder_forward.1} parent=1 // pred_fallthru
      _
    // Predicated region
    $region34: #{numeric_encoder_forward.1} parent=1 // pred_check
      _
    $region35: #{numeric_encoder_forward.1} parent=1 // pred_check_branch
      %352 = sbr.rel (0) target = $region37
    $region36: #{numeric_encoder_forward.1} parent=1 // pred_region
      %353 = dma.done [#allocation3], 128
    $region37: #{numeric_encoder_forward.1} parent=1 // pred_fallthru
      _
    %354 = vsyncpa [#allocation3], 1

</llo_original>
